<compile_context>
chip_gen: v7x
topology: tpu7x:2x2x1
jax: 0.10.0
libtpu: 0.0.40
codegen_flags: <defaults>
</compile_context>

<pallas_src>
import functools

import jax
import jax.numpy as jnp
from jax.experimental import pallas as pl
from jax.experimental.pallas import tpu as pltpu


def _round_up(x, m):
    return (x + m - 1) // m * m


def _pick_tile(dim, candidates, full_cap):
    """Largest candidate dividing `dim`; use the full dim when it is small enough."""
    if dim <= full_cap:
        return dim
    for c in candidates:
        if dim % c == 0:
            return c
    return dim  # fallback: single tile spanning the whole (padded) dim


def _blend_kernel_single(w_ref, pt_ref, bias_ref, out_ref):
    """grid = (o_tiles, b_tiles, 1): whole K resident, no accumulator revisit loop."""
    acc = jnp.dot(w_ref[...], pt_ref[...], preferred_element_type=jnp.float32)
    out_ref[...] = jnp.maximum(acc + bias_ref[...], 0.0).astype(out_ref.dtype)


def _blend_kernel_multi(w_ref, pt_ref, bias_ref, out_ref, acc_ref):
    """K streamed over the last grid axis; f32 scratch accumulator in VMEM."""
    k = pl.program_id(2)

    @pl.when(k == 0)
    def _init():
        acc_ref[...] = jnp.zeros_like(acc_ref)

    acc_ref[...] += jnp.dot(w_ref[...], pt_ref[...],
                            preferred_element_type=jnp.float32)

    @pl.when(k == pl.num_programs(2) - 1)
    def _finalize():
        out_ref[...] = jnp.maximum(acc_ref[...] + bias_ref[...],
                                   0.0).astype(out_ref.dtype)


def prepare_blend_weights(weight, bias, *, param_dtype=jnp.bfloat16):
    """One-time (init-time) flatten + pad of the bilinear parameters.

    weight: (O, L, R), bias: (O,)  ->
      w2    (O_pad, K_pad) in param_dtype  (rows = outputs, cols = i*R + j)
      bias2 (O_pad, 1)     in float32
    O pads only to 16-row sublane granularity; K pads only to 128 lanes.
    """
    O, L, R = weight.shape
    K = L * R
    O_pad = _round_up(O, 16)
    K_pad = _round_up(K, 128)
    w2 = weight.reshape(O, K)                      # contiguous reshape, no transpose needed
    w2 = jnp.pad(w2, ((0, O_pad - O), (0, K_pad - K))).astype(param_dtype)
    bias2 = jnp.pad(bias, (0, O_pad - O)).reshape(O_pad, 1).astype(jnp.float32)
    return w2, bias2


@functools.partial(jax.jit, static_argnames=("out_size", "to", "tb", "tk"))
def blend_forward(left, right, w2, bias2, *, out_size, to=None, tb=None, tk=None):
    """left: (B, L), right: (B, R); w2/bias2 from prepare_blend_weights -> (B, out_size)."""
    B, L = left.shape
    _, R = right.shape
    K = L * R
    O_pad, K_pad = w2.shape
    assert K_pad >= K and O_pad >= out_size
    B_pad = _round_up(B, 128)

    # Tiles: divisors of the padded dims (never pad to tile size). Caps keep the
    # double-buffered bf16 working set well under v5e's 16 MiB scoped-VMEM default.
    to = to if to is not None else _pick_tile(O_pad, (512, 256, 128, 64, 32, 16, 8), 512)
    tb = tb if tb is not None else _pick_tile(B_pad, (256, 128), 256)
    tk = tk if tk is not None else _pick_tile(K_pad, (2048, 1024, 512, 256, 128), 2048)
    assert O_pad % to == 0 and B_pad % tb == 0 and K_pad % tk == 0

    # P^T[i*R + j, b] = left[b, i] * right[b, j]. Cast to the param dtype (bf16) so the
    # MXU runs its native bf16 path; accumulation in the kernel stays f32.
    pt = (left.T[:, None, :] * right.T[None, :, :]).reshape(K, B)
    pt = jnp.pad(pt, ((0, K_pad - K), (0, B_pad - B))).astype(w2.dtype)

    grid = (O_pad // to, B_pad // tb, K_pad // tk)
    single_k = grid[2] == 1
    kernel = _blend_kernel_single if single_k else _blend_kernel_multi
    scratch = [] if single_k else [pltpu.VMEM((to, tb), jnp.float32)]

    out_t = pl.pallas_call(
        kernel,
        out_shape=jax.ShapeDtypeStruct((O_pad, B_pad), left.dtype),
        grid_spec=pltpu.PrefetchScalarGridSpec(
            num_scalar_prefetch=0,
            grid=grid,
            in_specs=[
                pl.BlockSpec((to, tk), lambda o, b, k: (o, k)),   # weight streams over K
                pl.BlockSpec((tk, tb), lambda o, b, k: (k, b)),   # P^T tile
                pl.BlockSpec((to, 1), lambda o, b, k: (o, 0)),    # bias column (ignores b, k)
            ],
            out_specs=pl.BlockSpec((to, tb), lambda o, b, k: (o, b)),
            scratch_shapes=scratch,
        ),
        compiler_params=pltpu.CompilerParams(
            dimension_semantics=("parallel", "parallel", "arbitrary")),
    )(w2, pt, bias2)

    # Note: for large O with many o-tiles, holding the full (K_pad, tb) P^T block
    # resident (index_map ignoring o, slicing with pl.ds inside the kernel) would
    # remove the per-o-tile P re-fetch; skipped here since P traffic is negligible.
    return out_t[:out_size, :B].T


def blend_reference(left, right, weight, bias):
    out = jnp.einsum("bi,oij,bj->bo", left, weight, right,
                     precision=jax.lax.Precision.HIGHEST) + bias[None, :]
    return jnp.maximum(out, 0.0)


if __name__ == "__main__":
    # Small shapes consistent with the module's forward.
    B = 2          # batch
    L = 32         # left_size
    R = 32         # right_size
    O = 16         # output_size

    key = jax.random.PRNGKey(0)
    k_left, k_right, k_w, k_b = jax.random.split(key, 4)

    left = jax.random.normal(k_left, (B, L), dtype=jnp.float32)
    right = jax.random.normal(k_right, (B, R), dtype=jnp.float32)

    # Deterministic parameter init (mimics PyTorch's uniform(-1/sqrt(L), 1/sqrt(L))).
    bound = 1.0 / jnp.sqrt(jnp.float32(L))
    weight = jax.random.uniform(k_w, (O, L, R), dtype=jnp.float32,
                                minval=-bound, maxval=bound)
    bias = jax.random.uniform(k_b, (O,), dtype=jnp.float32,
                              minval=-bound, maxval=bound)

    # Once, at init time: bf16 params (K_pad = 1024, O_pad = 16 -> grid (1, 1, 1)).
    w2, bias2 = prepare_blend_weights(weight, bias)
    out = blend_forward(left, right, w2, bias2, out_size=O)
    out = jax.block_until_ready(out)
    assert out.shape == (B, O)

    # Tight check vs a bf16-aware reference (quantize W and the outer product exactly
    # as the kernel does; remaining difference is only f32 summation order).
    w_q = weight.astype(jnp.bfloat16).astype(jnp.float32)
    p_q = (left[:, :, None] * right[:, None, :]).astype(jnp.bfloat16).astype(jnp.float32)
    ref_q = jnp.maximum(jnp.einsum("blr,olr->bo", p_q, w_q) + bias[None, :], 0.0)
    assert jnp.allclose(out, ref_q, atol=1e-3, rtol=1e-3), "mismatch vs bf16-quantized ref"

    # Loose sanity check vs the pure f32 reference (bf16 params change numerics slightly).
    ref = blend_reference(left, right, weight, bias)
    assert jnp.allclose(out, ref, atol=5e-2, rtol=5e-2), "mismatch vs f32 reference"

    print("KERNEL_OK")
</pallas_src>

<mosaic_0001>
module attributes {stable_mosaic.version = 11 : i64} {
  func.func @_blend_kernel_single(%arg0: i32, %arg1: i32, %arg2: i32, %arg3: memref<16x1024xbf16, #tpu.memory_space<vmem>>, %arg4: memref<1024x128xbf16, #tpu.memory_space<vmem>>, %arg5: memref<16x1xf32, #tpu.memory_space<vmem>>, %arg6: memref<16x128xf32, #tpu.memory_space<vmem>>) attributes {dimension_semantics = [#tpu.dimension_semantics<parallel>, #tpu.dimension_semantics<parallel>, #tpu.dimension_semantics<arbitrary>], iteration_bounds = array<i64: 1, 1, 1>, scalar_prefetch = 0 : i64, scratch_operands = 0 : i64, tpu.core_type = #tpu.core_type<tc>, window_params = [{transform_indices = @transform_0, window_bounds = array<i64: 16, 1024>}, {transform_indices = @transform_1, window_bounds = array<i64: 1024, 128>}, {transform_indices = @transform_2, window_bounds = array<i64: 16, 1>}, {transform_indices = @transform_3, window_bounds = array<i64: 16, 128>}]} {
    %c0 = arith.constant 0 : index
    %c0_0 = arith.constant 0 : index
    %0 = vector.load %arg3[%c0, %c0_0] : memref<16x1024xbf16, #tpu.memory_space<vmem>>, vector<16x1024xbf16>
    %c0_1 = arith.constant 0 : index
    %c0_2 = arith.constant 0 : index
    %1 = vector.load %arg4[%c0_1, %c0_2] : memref<1024x128xbf16, #tpu.memory_space<vmem>>, vector<1024x128xbf16>
    %cst = arith.constant dense<0.000000e+00> : vector<16x128xf32>
    %2 = tpu.matmul %0, %1, %cst {dimension_numbers = #tpu.dot_dimension_numbers<[1], [0], [0], [1], [0, 0, 1, 1], [], []>} : vector<16x1024xbf16>, vector<1024x128xbf16>, vector<16x128xf32> -> vector<16x128xf32>
    %c0_3 = arith.constant 0 : index
    %c0_4 = arith.constant 0 : index
    %3 = vector.load %arg5[%c0_3, %c0_4] : memref<16x1xf32, #tpu.memory_space<vmem>>, vector<16x1xf32>
    %4 = vector.broadcast %3 : vector<16x1xf32> to vector<16x128xf32>
    %5 = arith.addf %2, %4 : vector<16x128xf32>
    %cst_5 = arith.constant 0.000000e+00 : f32
    %6 = vector.broadcast %cst_5 : f32 to vector<16x128xf32>
    %7 = arith.maximumf %5, %6 : vector<16x128xf32>
    %c0_6 = arith.constant 0 : index
    %c0_7 = arith.constant 0 : index
    %8 = vector.load %arg6[%c0_6, %c0_7] : memref<16x128xf32, #tpu.memory_space<vmem>>, vector<16x128xf32>
    tpu.vector_store %arg6[%c0_6, %c0_7], %7 {strides = array<i32>} : memref<16x128xf32, #tpu.memory_space<vmem>>, vector<16x128xf32>,
    return
  }
  func.func @transform_0(%arg0: i32, %arg1: i32, %arg2: i32) -> (i32, i32) {
    %c0_i32 = arith.constant 0 : i32
    return %arg0, %arg2 : i32, i32
  }
  func.func @transform_1(%arg0: i32, %arg1: i32, %arg2: i32) -> (i32, i32) {
    %c0_i32 = arith.constant 0 : i32
    return %arg2, %arg1 : i32, i32
  }
  func.func @transform_2(%arg0: i32, %arg1: i32, %arg2: i32) -> (i32, i32) {
    %c0_i32 = arith.constant 0 : i32
    %c0_i32_0 = arith.constant 0 : i32
    return %arg0, %c0_i32 : i32, i32
  }
  func.func @transform_3(%arg0: i32, %arg1: i32, %arg2: i32) -> (i32, i32) {
    %c0_i32 = arith.constant 0 : i32
    return %arg0, %arg1 : i32, i32
  }
}

</mosaic_0001>

<llo_original>
// kernel: blend_forward.1
$region0: #{blend_forward.1}
  #allocation0 [shape = 'u32[]', space=smem, size = 0x4, offset = 0x4, fixed_abs, tag = 'smem constant byte address 0x4 - core index']
  #allocation1 [shape = 'u32[144,128]{1,0:T(1,128)}', space=vmem, size = 0x12000, scoped, tag = 'internal scratch']
  %s0 = inlined_call_operand.vmem [shape: bf16[16,1024], index: 0, kind: input, shape index: {}]
  %s1 = inlined_call_operand.vmem [shape: bf16[1024,128], index: 1, kind: input, shape index: {}]
  %s2 = inlined_call_operand.vmem [shape: f32[16,1], index: 2, kind: input, shape index: {}]
  %s3 = inlined_call_operand.vmem [shape: f32[16,128], index: 3, kind: output, shape index: {}]
  %s4 = sld [smem:[#allocation0]]
  $region22: #{blend_forward.1} parent=0
    _
  %s6 = ssub.s32 1, %s4
  %s7 = scalar_select 0, %s6, %s4
  // Predicated region
  $region2: #{blend_forward.1} parent=0 // pred_check
    _
  $region3: #{blend_forward.1} parent=0 // pred_check_branch
    %9 = sbr.rel (0) target = $region5
  $region4: #{blend_forward.1} parent=0 // pred_region
    _
  $region5: #{blend_forward.1} parent=0 // pred_fallthru
    _
  // Predicated region
  $region6: #{blend_forward.1} parent=0 // pred_check
    _
  $region7: #{blend_forward.1} parent=0 // pred_check_branch
    %11 = sbr.rel (0) target = $region9
  $region8: #{blend_forward.1} parent=0 // pred_region
    _
  $region9: #{blend_forward.1} parent=0 // pred_fallthru
    _
  // Predicated region
  $region10: #{blend_forward.1} parent=0 // pred_check
    _
  $region11: #{blend_forward.1} parent=0 // pred_check_branch
    %13 = sbr.rel (0) target = $region13
  $region12: #{blend_forward.1} parent=0 // pred_region
    _
  $region13: #{blend_forward.1} parent=0 // pred_fallthru
    _
  %v15 = vld [vmem:[%s0] sm:$0xff]
  %v16 = vld [vmem:[%s0 + $0x8] sm:$0xff]
  %v17 = vld [vmem:[%s0 + $0x10] sm:$0xff]
  %v18 = vld [vmem:[%s0 + $0x18] sm:$0xff]
  %v19 = vld [vmem:[%s0 + $0x20] sm:$0xff]
  %v20 = vld [vmem:[%s0 + $0x28] sm:$0xff]
  %v21 = vld [vmem:[%s0 + $0x30] sm:$0xff]
  %v22 = vld [vmem:[%s0 + $0x38] sm:$0xff]
  %v23 = vld [vmem:[%s1] sm:$0xf]
  %v24 = vld [vmem:[%s1 + $0x4] sm:$0xf]
  %v25 = vld [vmem:[%s1 + $0x8] sm:$0xf]
  %v26 = vld [vmem:[%s1 + $0xc] sm:$0xf]
  %v27 = vld [vmem:[%s1 + $0x10] sm:$0xf]
  %v28 = vld [vmem:[%s1 + $0x14] sm:$0xf]
  %v29 = vld [vmem:[%s1 + $0x18] sm:$0xf]
  %v30 = vld [vmem:[%s1 + $0x1c] sm:$0xf]
  %v31 = vld [vmem:[%s1 + $0x20] sm:$0xf]
  %v32 = vld [vmem:[%s1 + $0x24] sm:$0xf]
  %v33 = vld [vmem:[%s1 + $0x28] sm:$0xf]
  %v34 = vld [vmem:[%s1 + $0x2c] sm:$0xf]
  %v35 = vld [vmem:[%s1 + $0x30] sm:$0xf]
  %v36 = vld [vmem:[%s1 + $0x34] sm:$0xf]
  %v37 = vld [vmem:[%s1 + $0x38] sm:$0xf]
  %v38 = vld [vmem:[%s1 + $0x3c] sm:$0xf]
  %v39 = vld [vmem:[%s1 + $0x40] sm:$0xf]
  %v40 = vld [vmem:[%s1 + $0x44] sm:$0xf]
  %v41 = vld [vmem:[%s1 + $0x48] sm:$0xf]
  %v42 = vld [vmem:[%s1 + $0x4c] sm:$0xf]
  %v43 = vld [vmem:[%s1 + $0x50] sm:$0xf]
  %v44 = vld [vmem:[%s1 + $0x54] sm:$0xf]
  %v45 = vld [vmem:[%s1 + $0x58] sm:$0xf]
  %v46 = vld [vmem:[%s1 + $0x5c] sm:$0xf]
  %v47 = vld [vmem:[%s1 + $0x60] sm:$0xf]
  %v48 = vld [vmem:[%s1 + $0x64] sm:$0xf]
  %v49 = vld [vmem:[%s1 + $0x68] sm:$0xf]
  %v50 = vld [vmem:[%s1 + $0x6c] sm:$0xf]
  %v51 = vld [vmem:[%s1 + $0x70] sm:$0xf]
  %v52 = vld [vmem:[%s1 + $0x74] sm:$0xf]
  %v53 = vld [vmem:[%s1 + $0x78] sm:$0xf]
  %v54 = vld [vmem:[%s1 + $0x7c] sm:$0xf]
  %v55 = vld [vmem:[%s1 + $0x80] sm:$0xf]
  %v56 = vld [vmem:[%s1 + $0x84] sm:$0xf]
  %v57 = vld [vmem:[%s1 + $0x88] sm:$0xf]
  %v58 = vld [vmem:[%s1 + $0x8c] sm:$0xf]
  %v59 = vld [vmem:[%s1 + $0x90] sm:$0xf]
  %v60 = vld [vmem:[%s1 + $0x94] sm:$0xf]
  %v61 = vld [vmem:[%s1 + $0x98] sm:$0xf]
  %v62 = vld [vmem:[%s1 + $0x9c] sm:$0xf]
  %v63 = vld [vmem:[%s1 + $0xa0] sm:$0xf]
  %v64 = vld [vmem:[%s1 + $0xa4] sm:$0xf]
  %v65 = vld [vmem:[%s1 + $0xa8] sm:$0xf]
  %v66 = vld [vmem:[%s1 + $0xac] sm:$0xf]
  %v67 = vld [vmem:[%s1 + $0xb0] sm:$0xf]
  %v68 = vld [vmem:[%s1 + $0xb4] sm:$0xf]
  %v69 = vld [vmem:[%s1 + $0xb8] sm:$0xf]
  %v70 = vld [vmem:[%s1 + $0xbc] sm:$0xf]
  %v71 = vld [vmem:[%s1 + $0xc0] sm:$0xf]
  %v72 = vld [vmem:[%s1 + $0xc4] sm:$0xf]
  %v73 = vld [vmem:[%s1 + $0xc8] sm:$0xf]
  %v74 = vld [vmem:[%s1 + $0xcc] sm:$0xf]
  %v75 = vld [vmem:[%s1 + $0xd0] sm:$0xf]
  %v76 = vld [vmem:[%s1 + $0xd4] sm:$0xf]
  %v77 = vld [vmem:[%s1 + $0xd8] sm:$0xf]
  %v78 = vld [vmem:[%s1 + $0xdc] sm:$0xf]
  %v79 = vld [vmem:[%s1 + $0xe0] sm:$0xf]
  %v80 = vld [vmem:[%s1 + $0xe4] sm:$0xf]
  %v81 = vld [vmem:[%s1 + $0xe8] sm:$0xf]
  %v82 = vld [vmem:[%s1 + $0xec] sm:$0xf]
  %v83 = vld [vmem:[%s1 + $0xf0] sm:$0xf]
  %v84 = vld [vmem:[%s1 + $0xf4] sm:$0xf]
  %v85 = vld [vmem:[%s1 + $0xf8] sm:$0xf]
  %v86 = vld [vmem:[%s1 + $0xfc] sm:$0xf]
  %v87 = vld [vmem:[%s1 + $0x100] sm:$0xf]
  %v88 = vld [vmem:[%s1 + $0x104] sm:$0xf]
  %v89 = vld [vmem:[%s1 + $0x108] sm:$0xf]
  %v90 = vld [vmem:[%s1 + $0x10c] sm:$0xf]
  %v91 = vld [vmem:[%s1 + $0x110] sm:$0xf]
  %v92 = vld [vmem:[%s1 + $0x114] sm:$0xf]
  %v93 = vld [vmem:[%s1 + $0x118] sm:$0xf]
  %v94 = vld [vmem:[%s1 + $0x11c] sm:$0xf]
  %v95 = vld [vmem:[%s1 + $0x120] sm:$0xf]
  %v96 = vld [vmem:[%s1 + $0x124] sm:$0xf]
  %v97 = vld [vmem:[%s1 + $0x128] sm:$0xf]
  %v98 = vld [vmem:[%s1 + $0x12c] sm:$0xf]
  %v99 = vld [vmem:[%s1 + $0x130] sm:$0xf]
  %v100 = vld [vmem:[%s1 + $0x134] sm:$0xf]
  %v101 = vld [vmem:[%s1 + $0x138] sm:$0xf]
  %v102 = vld [vmem:[%s1 + $0x13c] sm:$0xf]
  %v103 = vld [vmem:[%s1 + $0x140] sm:$0xf]
  %v104 = vld [vmem:[%s1 + $0x144] sm:$0xf]
  %v105 = vld [vmem:[%s1 + $0x148] sm:$0xf]
  %v106 = vld [vmem:[%s1 + $0x14c] sm:$0xf]
  %v107 = vld [vmem:[%s1 + $0x150] sm:$0xf]
  %v108 = vld [vmem:[%s1 + $0x154] sm:$0xf]
  %v109 = vld [vmem:[%s1 + $0x158] sm:$0xf]
  %v110 = vld [vmem:[%s1 + $0x15c] sm:$0xf]
  %v111 = vld [vmem:[%s1 + $0x160] sm:$0xf]
  %v112 = vld [vmem:[%s1 + $0x164] sm:$0xf]
  %v113 = vld [vmem:[%s1 + $0x168] sm:$0xf]
  %v114 = vld [vmem:[%s1 + $0x16c] sm:$0xf]
  %v115 = vld [vmem:[%s1 + $0x170] sm:$0xf]
  %v116 = vld [vmem:[%s1 + $0x174] sm:$0xf]
  %v117 = vld [vmem:[%s1 + $0x178] sm:$0xf]
  %v118 = vld [vmem:[%s1 + $0x17c] sm:$0xf]
  %v119 = vld [vmem:[%s1 + $0x180] sm:$0xf]
  %v120 = vld [vmem:[%s1 + $0x184] sm:$0xf]
  %v121 = vld [vmem:[%s1 + $0x188] sm:$0xf]
  %v122 = vld [vmem:[%s1 + $0x18c] sm:$0xf]
  %v123 = vld [vmem:[%s1 + $0x190] sm:$0xf]
  %v124 = vld [vmem:[%s1 + $0x194] sm:$0xf]
  %v125 = vld [vmem:[%s1 + $0x198] sm:$0xf]
  %v126 = vld [vmem:[%s1 + $0x19c] sm:$0xf]
  %v127 = vld [vmem:[%s1 + $0x1a0] sm:$0xf]
  %v128 = vld [vmem:[%s1 + $0x1a4] sm:$0xf]
  %v129 = vld [vmem:[%s1 + $0x1a8] sm:$0xf]
  %v130 = vld [vmem:[%s1 + $0x1ac] sm:$0xf]
  %v131 = vld [vmem:[%s1 + $0x1b0] sm:$0xf]
  %v132 = vld [vmem:[%s1 + $0x1b4] sm:$0xf]
  %v133 = vld [vmem:[%s1 + $0x1b8] sm:$0xf]
  %v134 = vld [vmem:[%s1 + $0x1bc] sm:$0xf]
  %v135 = vld [vmem:[%s1 + $0x1c0] sm:$0xf]
  %v136 = vld [vmem:[%s1 + $0x1c4] sm:$0xf]
  %v137 = vld [vmem:[%s1 + $0x1c8] sm:$0xf]
  %v138 = vld [vmem:[%s1 + $0x1cc] sm:$0xf]
  %v139 = vld [vmem:[%s1 + $0x1d0] sm:$0xf]
  %v140 = vld [vmem:[%s1 + $0x1d4] sm:$0xf]
  %v141 = vld [vmem:[%s1 + $0x1d8] sm:$0xf]
  %v142 = vld [vmem:[%s1 + $0x1dc] sm:$0xf]
  %v143 = vld [vmem:[%s1 + $0x1e0] sm:$0xf]
  %v144 = vld [vmem:[%s1 + $0x1e4] sm:$0xf]
  %v145 = vld [vmem:[%s1 + $0x1e8] sm:$0xf]
  %v146 = vld [vmem:[%s1 + $0x1ec] sm:$0xf]
  %v147 = vld [vmem:[%s1 + $0x1f0] sm:$0xf]
  %v148 = vld [vmem:[%s1 + $0x1f4] sm:$0xf]
  %v149 = vld [vmem:[%s1 + $0x1f8] sm:$0xf]
  %v150 = vld [vmem:[%s1 + $0x1fc] sm:$0xf]
  %v151 = vld [vmem:[%s2] sm:$0xff]
  %v152 = vld [vmem:[%s2 + $0x8] sm:$0xff]
  %154 = vset.pattern.permute.xlu0 0
  %155 = vperm.xlu0 %154, %v151
  %v156 = vpop.permute.xlu0 %155
  %159 = vset.pattern.permute.xlu0 0
  %160 = vperm.xlu0 %159, %v152
  %v161 = vpop.permute.xlu0 %160
  %v171 = vunpack.c.l.b16 %v15
  %v172 = vunpack.c.h.b16 %v15
  %v173 = vunpack.c.l.b16 %v16
  %v174 = vunpack.c.h.b16 %v16
  %v175 = vunpack.c.l.b16 %v17
  %v176 = vunpack.c.h.b16 %v17
  %v177 = vunpack.c.l.b16 %v18
  %v178 = vunpack.c.h.b16 %v18
  %v179 = vunpack.c.l.b16 %v19
  %v180 = vunpack.c.h.b16 %v19
  %v181 = vunpack.c.l.b16 %v20
  %v182 = vunpack.c.h.b16 %v20
  %v183 = vunpack.c.l.b16 %v21
  %v184 = vunpack.c.h.b16 %v21
  %v185 = vunpack.c.l.b16 %v22
  %v186 = vunpack.c.h.b16 %v22
  %v187 = vpack.c.b16 %v179, %v171
  %v188 = vpack.c.b16 %v180, %v172
  %v189 = vpack.c.b16 %v181, %v173
  %v190 = vpack.c.b16 %v182, %v174
  %v191 = vpack.c.b16 %v183, %v175
  %v192 = vpack.c.b16 %v184, %v176
  %v193 = vpack.c.b16 %v185, %v177
  %v194 = vpack.c.b16 %v186, %v178
  %v331 = vunpack.c.l.b16 %v23
  %v332 = vunpack.c.l.b16 %v24
  %v333 = vunpack.c.l.b16 %v25
  %v334 = vunpack.c.l.b16 %v26
  %v335 = vunpack.c.l.b16 %v27
  %v336 = vunpack.c.l.b16 %v28
  %v337 = vunpack.c.l.b16 %v29
  %v338 = vunpack.c.l.b16 %v30
  %v339 = vunpack.c.l.b16 %v31
  %v340 = vunpack.c.l.b16 %v32
  %v341 = vunpack.c.l.b16 %v33
  %v342 = vunpack.c.l.b16 %v34
  %v343 = vunpack.c.l.b16 %v35
  %v344 = vunpack.c.l.b16 %v36
  %v345 = vunpack.c.l.b16 %v37
  %v346 = vunpack.c.l.b16 %v38
  %v347 = vunpack.c.l.b16 %v39
  %v348 = vunpack.c.l.b16 %v40
  %v349 = vunpack.c.l.b16 %v41
  %v350 = vunpack.c.l.b16 %v42
  %v351 = vunpack.c.l.b16 %v43
  %v352 = vunpack.c.l.b16 %v44
  %v353 = vunpack.c.l.b16 %v45
  %v354 = vunpack.c.l.b16 %v46
  %v355 = vunpack.c.l.b16 %v47
  %v356 = vunpack.c.l.b16 %v48
  %v357 = vunpack.c.l.b16 %v49
  %v358 = vunpack.c.l.b16 %v50
  %v359 = vunpack.c.l.b16 %v51
  %v360 = vunpack.c.l.b16 %v52
  %v361 = vunpack.c.l.b16 %v53
  %v362 = vunpack.c.l.b16 %v54
  %v363 = vunpack.c.l.b16 %v55
  %v364 = vunpack.c.l.b16 %v56
  %v365 = vunpack.c.l.b16 %v57
  %v366 = vunpack.c.l.b16 %v58
  %v367 = vunpack.c.l.b16 %v59
  %v368 = vunpack.c.l.b16 %v60
  %v369 = vunpack.c.l.b16 %v61
  %v370 = vunpack.c.l.b16 %v62
  %v371 = vunpack.c.l.b16 %v63
  %v372 = vunpack.c.l.b16 %v64
  %v373 = vunpack.c.l.b16 %v65
  %v374 = vunpack.c.l.b16 %v66
  %v375 = vunpack.c.l.b16 %v67
  %v376 = vunpack.c.l.b16 %v68
  %v377 = vunpack.c.l.b16 %v69
  %v378 = vunpack.c.l.b16 %v70
  %v379 = vunpack.c.l.b16 %v71
  %v380 = vunpack.c.l.b16 %v72
  %v381 = vunpack.c.l.b16 %v73
  %v382 = vunpack.c.l.b16 %v74
  %v383 = vunpack.c.l.b16 %v75
  %v384 = vunpack.c.l.b16 %v76
  %v385 = vunpack.c.l.b16 %v77
  %v386 = vunpack.c.l.b16 %v78
  %v387 = vunpack.c.l.b16 %v79
  %v388 = vunpack.c.l.b16 %v80
  %v389 = vunpack.c.l.b16 %v81
  %v390 = vunpack.c.l.b16 %v82
  %v391 = vunpack.c.l.b16 %v83
  %v392 = vunpack.c.l.b16 %v84
  %v393 = vunpack.c.l.b16 %v85
  %v394 = vunpack.c.l.b16 %v86
  %v395 = vunpack.c.l.b16 %v87
  %v396 = vunpack.c.l.b16 %v88
  %v397 = vunpack.c.l.b16 %v89
  %v398 = vunpack.c.l.b16 %v90
  %v399 = vunpack.c.l.b16 %v91
  %v400 = vunpack.c.l.b16 %v92
  %v401 = vunpack.c.l.b16 %v93
  %v402 = vunpack.c.l.b16 %v94
  %v403 = vunpack.c.l.b16 %v95
  %v404 = vunpack.c.l.b16 %v96
  %v405 = vunpack.c.l.b16 %v97
  %v406 = vunpack.c.l.b16 %v98
  %v407 = vunpack.c.l.b16 %v99
  %v408 = vunpack.c.l.b16 %v100
  %v409 = vunpack.c.l.b16 %v101
  %v410 = vunpack.c.l.b16 %v102
  %v411 = vunpack.c.l.b16 %v103
  %v412 = vunpack.c.l.b16 %v104
  %v413 = vunpack.c.l.b16 %v105
  %v414 = vunpack.c.l.b16 %v106
  %v415 = vunpack.c.l.b16 %v107
  %v416 = vunpack.c.l.b16 %v108
  %v417 = vunpack.c.l.b16 %v109
  %v418 = vunpack.c.l.b16 %v110
  %v419 = vunpack.c.l.b16 %v111
  %v420 = vunpack.c.l.b16 %v112
  %v421 = vunpack.c.l.b16 %v113
  %v422 = vunpack.c.l.b16 %v114
  %v423 = vunpack.c.l.b16 %v115
  %v424 = vunpack.c.l.b16 %v116
  %v425 = vunpack.c.l.b16 %v117
  %v426 = vunpack.c.l.b16 %v118
  %v427 = vunpack.c.l.b16 %v119
  %v428 = vunpack.c.l.b16 %v120
  %v429 = vunpack.c.l.b16 %v121
  %v430 = vunpack.c.l.b16 %v122
  %v431 = vunpack.c.l.b16 %v123
  %v432 = vunpack.c.l.b16 %v124
  %v433 = vunpack.c.l.b16 %v125
  %v434 = vunpack.c.l.b16 %v126
  %v435 = vunpack.c.l.b16 %v127
  %v436 = vunpack.c.l.b16 %v128
  %v437 = vunpack.c.l.b16 %v129
  %v438 = vunpack.c.l.b16 %v130
  %v439 = vunpack.c.l.b16 %v131
  %v440 = vunpack.c.l.b16 %v132
  %v441 = vunpack.c.l.b16 %v133
  %v442 = vunpack.c.l.b16 %v134
  %v443 = vunpack.c.l.b16 %v135
  %v444 = vunpack.c.l.b16 %v136
  %v445 = vunpack.c.l.b16 %v137
  %v446 = vunpack.c.l.b16 %v138
  %v447 = vunpack.c.l.b16 %v139
  %v448 = vunpack.c.l.b16 %v140
  %v449 = vunpack.c.l.b16 %v141
  %v450 = vunpack.c.l.b16 %v142
  %v451 = vunpack.c.l.b16 %v143
  %v452 = vunpack.c.l.b16 %v144
  %v453 = vunpack.c.l.b16 %v145
  %v454 = vunpack.c.l.b16 %v146
  %v455 = vunpack.c.l.b16 %v147
  %v456 = vunpack.c.l.b16 %v148
  %v457 = vunpack.c.l.b16 %v149
  %v458 = vunpack.c.l.b16 %v150
  %v459 = vpack.c.b16 %v332, %v331
  %v460 = vpack.c.b16 %v334, %v333
  %v461 = vpack.c.b16 %v336, %v335
  %v462 = vpack.c.b16 %v338, %v337
  %v463 = vpack.c.b16 %v340, %v339
  %v464 = vpack.c.b16 %v342, %v341
  %v465 = vpack.c.b16 %v344, %v343
  %v466 = vpack.c.b16 %v346, %v345
  %v467 = vpack.c.b16 %v348, %v347
  %v468 = vpack.c.b16 %v350, %v349
  %v469 = vpack.c.b16 %v352, %v351
  %v470 = vpack.c.b16 %v354, %v353
  %v471 = vpack.c.b16 %v356, %v355
  %v472 = vpack.c.b16 %v358, %v357
  %v473 = vpack.c.b16 %v360, %v359
  %v474 = vpack.c.b16 %v362, %v361
  %v475 = vpack.c.b16 %v364, %v363
  %v476 = vpack.c.b16 %v366, %v365
  %v477 = vpack.c.b16 %v368, %v367
  %v478 = vpack.c.b16 %v370, %v369
  %v479 = vpack.c.b16 %v372, %v371
  %v480 = vpack.c.b16 %v374, %v373
  %v481 = vpack.c.b16 %v376, %v375
  %v482 = vpack.c.b16 %v378, %v377
  %v483 = vpack.c.b16 %v380, %v379
  %v484 = vpack.c.b16 %v382, %v381
  %v485 = vpack.c.b16 %v384, %v383
  %v486 = vpack.c.b16 %v386, %v385
  %v487 = vpack.c.b16 %v388, %v387
  %v488 = vpack.c.b16 %v390, %v389
  %v489 = vpack.c.b16 %v392, %v391
  %v490 = vpack.c.b16 %v394, %v393
  %v491 = vpack.c.b16 %v396, %v395
  %v492 = vpack.c.b16 %v398, %v397
  %v493 = vpack.c.b16 %v400, %v399
  %v494 = vpack.c.b16 %v402, %v401
  %v495 = vpack.c.b16 %v404, %v403
  %v496 = vpack.c.b16 %v406, %v405
  %v497 = vpack.c.b16 %v408, %v407
  %v498 = vpack.c.b16 %v410, %v409
  %v499 = vpack.c.b16 %v412, %v411
  %v500 = vpack.c.b16 %v414, %v413
  %v501 = vpack.c.b16 %v416, %v415
  %v502 = vpack.c.b16 %v418, %v417
  %v503 = vpack.c.b16 %v420, %v419
  %v504 = vpack.c.b16 %v422, %v421
  %v505 = vpack.c.b16 %v424, %v423
  %v506 = vpack.c.b16 %v426, %v425
  %v507 = vpack.c.b16 %v428, %v427
  %v508 = vpack.c.b16 %v430, %v429
  %v509 = vpack.c.b16 %v432, %v431
  %v510 = vpack.c.b16 %v434, %v433
  %v511 = vpack.c.b16 %v436, %v435
  %v512 = vpack.c.b16 %v438, %v437
  %v513 = vpack.c.b16 %v440, %v439
  %v514 = vpack.c.b16 %v442, %v441
  %v515 = vpack.c.b16 %v444, %v443
  %v516 = vpack.c.b16 %v446, %v445
  %v517 = vpack.c.b16 %v448, %v447
  %v518 = vpack.c.b16 %v450, %v449
  %v519 = vpack.c.b16 %v452, %v451
  %v520 = vpack.c.b16 %v454, %v453
  %v521 = vpack.c.b16 %v456, %v455
  %v522 = vpack.c.b16 %v458, %v457
  %587 = vmatprep.subr.bf16.mxu0 0
  %588 = vmatpush1.bf16.msra.mxu0 %v459
  %589 = vmatprep.subr.bf16.mxu0 0
  %590 = vmatpush1.bf16.msra.mxu0 %v460
  %591 = vmatprep.subr.bf16.mxu0 0
  %592 = vmatpush1.bf16.msra.mxu0 %v461
  %593 = vmatprep.subr.bf16.mxu0 0
  %594 = vmatpush1.bf16.msra.mxu0 %v462
  %595 = vmatprep.subr.bf16.mxu0 0
  %596 = vmatpush1.bf16.msra.mxu0 %v463
  %597 = vmatprep.subr.bf16.mxu0 0
  %598 = vmatpush1.bf16.msra.mxu0 %v464
  %599 = vmatprep.subr.bf16.mxu0 0
  %600 = vmatpush1.bf16.msra.mxu0 %v465
  %601 = vmatprep.subr.bf16.mxu0 0
  %602 = vmatpush1.bf16.msra.mxu0 %v466
  %603 = vmatprep.subr.bf16.mxu0 0
  %604 = vmatpush1.bf16.msra.mxu0 %v467
  %605 = vmatprep.subr.bf16.mxu0 0
  %606 = vmatpush1.bf16.msra.mxu0 %v468
  %607 = vmatprep.subr.bf16.mxu0 0
  %608 = vmatpush1.bf16.msra.mxu0 %v469
  %609 = vmatprep.subr.bf16.mxu0 0
  %610 = vmatpush1.bf16.msra.mxu0 %v470
  %611 = vmatprep.subr.bf16.mxu0 0
  %612 = vmatpush1.bf16.msra.mxu0 %v471
  %613 = vmatprep.subr.bf16.mxu0 0
  %614 = vmatpush1.bf16.msra.mxu0 %v472
  %615 = vmatprep.subr.bf16.mxu0 0
  %616 = vmatpush1.bf16.msra.mxu0 %v473
  %617 = vmatprep.subr.bf16.mxu0 0
  %618 = vmatpush1.bf16.msra.mxu0 %v474
  %619 = vmatprep.mubr.bf16.mxu0 %v188
  %620 = vmatmul.mubr.bf16.gmra.mrb[0].mxu0 %v187
  %v621 = vpop.f32.mrb[0].mxu0
  %v622 = vadd.f32 %v156, %v621
  %v623 = vpop.f32.mrb[0].mxu0
  %v624 = vpop.f32.mrb[0].mxu0
  %v625 = vadd.f32 %v161, %v624
  %v626 = vpop.f32.mrb[0].mxu0
  %627 = vdwg.mxu0
  %628 = vmatprep.subr.bf16.mxu0 0
  %629 = vmatpush1.bf16.msra.mxu0 %v475
  %630 = vmatprep.subr.bf16.mxu0 0
  %631 = vmatpush1.bf16.msra.mxu0 %v476
  %632 = vmatprep.subr.bf16.mxu0 0
  %633 = vmatpush1.bf16.msra.mxu0 %v477
  %634 = vmatprep.subr.bf16.mxu0 0
  %635 = vmatpush1.bf16.msra.mxu0 %v478
  %636 = vmatprep.subr.bf16.mxu0 0
  %637 = vmatpush1.bf16.msra.mxu0 %v479
  %638 = vmatprep.subr.bf16.mxu0 0
  %639 = vmatpush1.bf16.msra.mxu0 %v480
  %640 = vmatprep.subr.bf16.mxu0 0
  %641 = vmatpush1.bf16.msra.mxu0 %v481
  %642 = vmatprep.subr.bf16.mxu0 0
  %643 = vmatpush1.bf16.msra.mxu0 %v482
  %644 = vmatprep.subr.bf16.mxu0 0
  %645 = vmatpush1.bf16.msra.mxu0 %v483
  %646 = vmatprep.subr.bf16.mxu0 0
  %647 = vmatpush1.bf16.msra.mxu0 %v484
  %648 = vmatprep.subr.bf16.mxu0 0
  %649 = vmatpush1.bf16.msra.mxu0 %v485
  %650 = vmatprep.subr.bf16.mxu0 0
  %651 = vmatpush1.bf16.msra.mxu0 %v486
  %652 = vmatprep.subr.bf16.mxu0 0
  %653 = vmatpush1.bf16.msra.mxu0 %v487
  %654 = vmatprep.subr.bf16.mxu0 0
  %655 = vmatpush1.bf16.msra.mxu0 %v488
  %656 = vmatprep.subr.bf16.mxu0 0
  %657 = vmatpush1.bf16.msra.mxu0 %v489
  %658 = vmatprep.subr.bf16.mxu0 0
  %659 = vmatpush1.bf16.msra.mxu0 %v490
  %660 = vmatprep.mubr.bf16.mxu0 %v190
  %661 = vmatmul.mubr.bf16.gmra.mrb[0].mxu0 %v189
  %v662 = vpop.f32.mrb[0].mxu0
  %v663 = vadd.f32 %v622, %v662
  %v664 = vpop.f32.mrb[0].mxu0
  %v665 = vpop.f32.mrb[0].mxu0
  %v666 = vadd.f32 %v625, %v665
  %v667 = vpop.f32.mrb[0].mxu0
  %668 = vdwg.mxu0
  %669 = vmatprep.subr.bf16.mxu0 0
  %670 = vmatpush1.bf16.msra.mxu0 %v491
  %671 = vmatprep.subr.bf16.mxu0 0
  %672 = vmatpush1.bf16.msra.mxu0 %v492
  %673 = vmatprep.subr.bf16.mxu0 0
  %674 = vmatpush1.bf16.msra.mxu0 %v493
  %675 = vmatprep.subr.bf16.mxu0 0
  %676 = vmatpush1.bf16.msra.mxu0 %v494
  %677 = vmatprep.subr.bf16.mxu0 0
  %678 = vmatpush1.bf16.msra.mxu0 %v495
  %679 = vmatprep.subr.bf16.mxu0 0
  %680 = vmatpush1.bf16.msra.mxu0 %v496
  %681 = vmatprep.subr.bf16.mxu0 0
  %682 = vmatpush1.bf16.msra.mxu0 %v497
  %683 = vmatprep.subr.bf16.mxu0 0
  %684 = vmatpush1.bf16.msra.mxu0 %v498
  %685 = vmatprep.subr.bf16.mxu0 0
  %686 = vmatpush1.bf16.msra.mxu0 %v499
  %687 = vmatprep.subr.bf16.mxu0 0
  %688 = vmatpush1.bf16.msra.mxu0 %v500
  %689 = vmatprep.subr.bf16.mxu0 0
  %690 = vmatpush1.bf16.msra.mxu0 %v501
  %691 = vmatprep.subr.bf16.mxu0 0
  %692 = vmatpush1.bf16.msra.mxu0 %v502
  %693 = vmatprep.subr.bf16.mxu0 0
  %694 = vmatpush1.bf16.msra.mxu0 %v503
  %695 = vmatprep.subr.bf16.mxu0 0
  %696 = vmatpush1.bf16.msra.mxu0 %v504
  %697 = vmatprep.subr.bf16.mxu0 0
  %698 = vmatpush1.bf16.msra.mxu0 %v505
  %699 = vmatprep.subr.bf16.mxu0 0
  %700 = vmatpush1.bf16.msra.mxu0 %v506
  %701 = vmatprep.mubr.bf16.mxu0 %v192
  %702 = vmatmul.mubr.bf16.gmra.mrb[0].mxu0 %v191
  %v703 = vpop.f32.mrb[0].mxu0
  %v704 = vadd.f32 %v663, %v703
  %v705 = vpop.f32.mrb[0].mxu0
  %v706 = vpop.f32.mrb[0].mxu0
  %v707 = vadd.f32 %v666, %v706
  %v708 = vpop.f32.mrb[0].mxu0
  %709 = vdwg.mxu0
  %710 = vmatprep.subr.bf16.mxu0 0
  %711 = vmatpush1.bf16.msra.mxu0 %v507
  %712 = vmatprep.subr.bf16.mxu0 0
  %713 = vmatpush1.bf16.msra.mxu0 %v508
  %714 = vmatprep.subr.bf16.mxu0 0
  %715 = vmatpush1.bf16.msra.mxu0 %v509
  %716 = vmatprep.subr.bf16.mxu0 0
  %717 = vmatpush1.bf16.msra.mxu0 %v510
  %718 = vmatprep.subr.bf16.mxu0 0
  %719 = vmatpush1.bf16.msra.mxu0 %v511
  %720 = vmatprep.subr.bf16.mxu0 0
  %721 = vmatpush1.bf16.msra.mxu0 %v512
  %722 = vmatprep.subr.bf16.mxu0 0
  %723 = vmatpush1.bf16.msra.mxu0 %v513
  %724 = vmatprep.subr.bf16.mxu0 0
  %725 = vmatpush1.bf16.msra.mxu0 %v514
  %726 = vmatprep.subr.bf16.mxu0 0
  %727 = vmatpush1.bf16.msra.mxu0 %v515
  %728 = vmatprep.subr.bf16.mxu0 0
  %729 = vmatpush1.bf16.msra.mxu0 %v516
  %730 = vmatprep.subr.bf16.mxu0 0
  %731 = vmatpush1.bf16.msra.mxu0 %v517
  %732 = vmatprep.subr.bf16.mxu0 0
  %733 = vmatpush1.bf16.msra.mxu0 %v518
  %734 = vmatprep.subr.bf16.mxu0 0
  %735 = vmatpush1.bf16.msra.mxu0 %v519
  %736 = vmatprep.subr.bf16.mxu0 0
  %737 = vmatpush1.bf16.msra.mxu0 %v520
  %738 = vmatprep.subr.bf16.mxu0 0
  %739 = vmatpush1.bf16.msra.mxu0 %v521
  %740 = vmatprep.subr.bf16.mxu0 0
  %741 = vmatpush1.bf16.msra.mxu0 %v522
  %742 = vmatprep.mubr.bf16.mxu0 %v194
  %743 = vmatmul.mubr.bf16.gmra.mrb[0].mxu0 %v193
  %v744 = vpop.f32.mrb[0].mxu0
  %v745 = vadd.f32 %v704, %v744
  %v746 = vpop.f32.mrb[0].mxu0
  %v747 = vpop.f32.mrb[0].mxu0
  %v748 = vadd.f32 %v707, %v747
  %v749 = vpop.f32.mrb[0].mxu0
  %750 = vdwg.mxu0
  %v751 = vmax.f32 %v745, 0.0
  %v752 = vmax.f32 %v748, 0.0
  %753 = vst [vmem:[%s3] sm:$0xff] %v751
  %754 = vst [vmem:[%s3 + $0x8] sm:$0xff] %v752
  // Predicated region
  $region14: #{blend_forward.1} parent=0 // pred_check
    _
  $region15: #{blend_forward.1} parent=0 // pred_check_branch
    %756 = sbr.rel (0) target = $region17
  $region16: #{blend_forward.1} parent=0 // pred_region
    _
  $region17: #{blend_forward.1} parent=0 // pred_fallthru
    _
  // Predicated region
  $region18: #{blend_forward.1} parent=0 // pred_check
    _
  $region19: #{blend_forward.1} parent=0 // pred_check_branch
    %758 = sbr.rel (0) target = $region21
  $region20: #{blend_forward.1} parent=0 // pred_region
    _
  $region21: #{blend_forward.1} parent=0 // pred_fallthru
    _

</llo_original>
